<compile_context>
chip_gen: v5e
topology: v5e:2x2
jax: 0.10.0
libtpu: 0.0.40
codegen_flags: <defaults>
</compile_context>

<pallas_src>
import jax
import jax.numpy as jnp
import numpy as np
from jax.experimental import pallas as pl
from jax.experimental.pallas import tpu as pltpu


# -----------------------------------------------------------------------------
# Pallas kernel: one batch element per grid step.
# -----------------------------------------------------------------------------
def relational_kernel(lens1_ref,   # SMEM [B]   i32  (scalar prefetch)
                      lens2_ref,   # SMEM [B]   i32  (scalar prefetch)
                      maxlen_ref,  # SMEM [1]   i32  (scalar prefetch)
                      x1_ref,      # VMEM [1, T1, D2] f32
                      x2_ref,      # VMEM [1, T2, D2] f32
                      w1_ref,      # VMEM [D2, Hp]    f32  (rows 0:D2 of Linear W)
                      w2_ref,      # VMEM [D2, Hp]    f32  (rows D2:2*D2 of Linear W)
                      bias_ref,    # VMEM [1, Hp]     f32
                      out_ref):    # VMEM [1, 1, Hp]  f32
    T1 = x1_ref.shape[1]
    T2 = x2_ref.shape[1]
    Hp = w1_ref.shape[1]

    b = pl.program_id(0)
    sl1 = lens1_ref[b]
    sl2 = lens2_ref[b]
    max_len = maxlen_ref[0]

    # Input projections (the only MXU work): concat(x1_i, x2_j) @ W
    # decomposes into a_i + c_j, so no pairwise matmuls are needed.
    a = jnp.dot(x1_ref[0], w1_ref[...], preferred_element_type=jnp.float32)   # [T1, Hp]
    c = jnp.dot(x2_ref[0], w2_ref[...], preferred_element_type=jnp.float32)   # [T2, Hp]
    c = c + bias_ref[...]                                                      # bias folded once

    # Valid-length mask over the j (x2) axis.
    j_idx = jax.lax.broadcasted_iota(jnp.int32, (T2, 1), 0)
    mask2 = (j_idx < sl2).astype(jnp.float32)                                  # [T2, 1]

    # Pairwise ReLU-sum over valid (i, j) pairs, streamed row-by-row of `a`
    # (keeps the intermediate at [T2, Hp] instead of [T1, T2, Hp]).
    acc = jnp.zeros((1, Hp), jnp.float32)
    for i in range(T1):                                   # static unroll, T1 is small
        row = jnp.maximum(a[i:i + 1, :] + c, 0.0) * mask2                      # [T2, Hp]
        valid_i = (i < sl1).astype(jnp.float32)
        acc = acc + valid_i * jnp.sum(row, axis=0, keepdims=True)

    # The PyTorch module pads every batch's pair list to max_len rows with
    # zeros and sums AFTER l_ff, so each padding row contributes ReLU(bias).
    n_real = sl1 * sl2
    pad_rows = (max_len - n_real).astype(jnp.float32)
    acc = acc + pad_rows * jnp.maximum(bias_ref[...], 0.0)

    out_ref[0] = acc / n_real.astype(jnp.float32)


# -----------------------------------------------------------------------------
# Wrapper: weight split / lane padding / pallas_call.
# -----------------------------------------------------------------------------
@jax.jit
def relational_net_forward(x1, seq_lens1, x2, seq_lens2, params):
    """x1: [B, T1, 2*dim_hid], x2: [B, T2, 2*dim_hid] (f32);
       seq_lens*: [B] int;  params: W [4*dim_hid, dim_hid], b [dim_hid].
       Returns [B, dim_hid] f32 (matches RelationalNet.forward in eval mode)."""
    B, T1, D2 = x1.shape
    _, T2, _ = x2.shape
    W = params["W"].astype(jnp.float32)          # [2*D2, H]
    bias = params["b"].astype(jnp.float32)       # [H]
    H = W.shape[1]

    # Lane-dense output: pad the Linear output dim to a multiple of 128.
    Hp = max(128, ((H + 127) // 128) * 128)
    pad = Hp - H
    W1 = jnp.pad(W[:D2], ((0, 0), (0, pad)))     # [D2, Hp]
    W2 = jnp.pad(W[D2:], ((0, 0), (0, pad)))     # [D2, Hp]
    bias_p = jnp.pad(bias, ((0, pad),)).reshape(1, Hp)

    lens1 = seq_lens1.astype(jnp.int32)
    lens2 = seq_lens2.astype(jnp.int32)
    maxlen = (jnp.max(lens1) * jnp.max(lens2)).astype(jnp.int32).reshape(1)

    grid_spec = pltpu.PrefetchScalarGridSpec(
        num_scalar_prefetch=3,
        grid=(B,),
        in_specs=[
            pl.BlockSpec((1, T1, D2), lambda b, l1, l2, ml: (b, 0, 0)),
            pl.BlockSpec((1, T2, D2), lambda b, l1, l2, ml: (b, 0, 0)),
            pl.BlockSpec((D2, Hp), lambda b, l1, l2, ml: (0, 0)),
            pl.BlockSpec((D2, Hp), lambda b, l1, l2, ml: (0, 0)),
            pl.BlockSpec((1, Hp), lambda b, l1, l2, ml: (0, 0)),
        ],
        out_specs=pl.BlockSpec((1, 1, Hp), lambda b, l1, l2, ml: (b, 0, 0)),
    )

    out = pl.pallas_call(
        relational_kernel,
        out_shape=jax.ShapeDtypeStruct((B, 1, Hp), jnp.float32),
        grid_spec=grid_spec,
        compiler_params=pltpu.CompilerParams(
            dimension_semantics=("parallel",)),
    )(lens1, lens2, maxlen,
      x1.astype(jnp.float32), x2.astype(jnp.float32), W1, W2, bias_p)

    return out.reshape(B, Hp)[:, :H]


# -----------------------------------------------------------------------------
# Deterministic param init (PyTorch Linear default: U(-1/sqrt(fan_in), +...)).
# W is stored already transposed for right-multiplication: [4*dim_hid, dim_hid].
# -----------------------------------------------------------------------------
def init_params(key, dim_hid):
    fan_in = 4 * dim_hid
    bound = 1.0 / np.sqrt(fan_in)
    kw, kb = jax.random.split(key)
    W = jax.random.uniform(kw, (fan_in, dim_hid), jnp.float32, -bound, bound)
    b = jax.random.uniform(kb, (dim_hid,), jnp.float32, -bound, bound)
    return {"W": W, "b": b}


# -----------------------------------------------------------------------------
# Pure-JAX reference mirroring the PyTorch code literally (eval-mode dropout).
# -----------------------------------------------------------------------------
def relational_net_ref(x1, seq_lens1, x2, seq_lens2, params):
    W, bias = params["W"], params["b"]
    sl1 = np.asarray(seq_lens1)
    sl2 = np.asarray(seq_lens2)
    max_len = int(sl1.max() * sl2.max())
    outs = []
    for b in range(x1.shape[0]):
        s1, s2 = int(sl1[b]), int(sl2[b])
        i1 = np.concatenate([[i] * s2 for i in range(s1)]).astype(np.int64)
        i2 = np.array(list(range(s2)) * s1, dtype=np.int64)
        x_pair = jnp.concatenate([x1[b][i1], x2[b][i2]], axis=1)      # [s1*s2, 4H]
        if max_len > s1 * s2:
            padding = jnp.zeros((max_len - s1 * s2, x_pair.shape[1]), jnp.float32)
            x_pair = jnp.concatenate([x_pair, padding], axis=0)
        y = jnp.maximum(jnp.dot(x_pair, W) + bias, 0.0)               # Linear + ReLU
        outs.append(y.sum(0) / float(s1 * s2))
    return jnp.stack(outs)


if __name__ == "__main__":
    B, T1, T2, DIM_HID = 4, 8, 8, 32          # x1/x2 feature dim = 2*DIM_HID = 64
    key = jax.random.PRNGKey(0)
    k1, k2, kp = jax.random.split(key, 3)

    x1 = jax.random.normal(k1, (B, T1, 2 * DIM_HID), jnp.float32)
    x2 = jax.random.normal(k2, (B, T2, 2 * DIM_HID), jnp.float32)
    seq_lens1 = jnp.array([8, 3, 5, 1], dtype=jnp.int32)
    seq_lens2 = jnp.array([2, 7, 4, 8], dtype=jnp.int32)
    params = init_params(kp, DIM_HID)

    out = relational_net_forward(x1, seq_lens1, x2, seq_lens2, params)
    out = jax.block_until_ready(out)
    assert out.shape == (B, DIM_HID), out.shape

    ref = relational_net_ref(x1, seq_lens1, x2, seq_lens2, params)
    assert jnp.allclose(out, ref, atol=1e-3, rtol=1e-3), "mismatch vs JAX reference"

    print("KERNEL_OK")
</pallas_src>

<mosaic_0001>
module attributes {stable_mosaic.version = 11 : i64} {
  func.func @relational_kernel(%arg0: i32, %arg1: memref<4xi32, #tpu.memory_space<smem>>, %arg2: memref<4xi32, #tpu.memory_space<smem>>, %arg3: memref<1xi32, #tpu.memory_space<smem>>, %arg4: memref<1x8x64xf32, #tpu.memory_space<vmem>>, %arg5: memref<1x8x64xf32, #tpu.memory_space<vmem>>, %arg6: memref<64x128xf32, #tpu.memory_space<vmem>>, %arg7: memref<64x128xf32, #tpu.memory_space<vmem>>, %arg8: memref<1x128xf32, #tpu.memory_space<vmem>>, %arg9: memref<1x1x128xf32, #tpu.memory_space<vmem>>) attributes {dimension_semantics = [#tpu.dimension_semantics<parallel>], iteration_bounds = array<i64: 4>, scalar_prefetch = 3 : i64, scratch_operands = 0 : i64, tpu.core_type = #tpu.core_type<tc>, window_params = [{transform_indices = @transform_0, window_bounds = array<i64: 1, 8, 64>}, {transform_indices = @transform_1, window_bounds = array<i64: 1, 8, 64>}, {pipeline_mode = #tpu.pipeline_mode<synchronous>, transform_indices = @transform_2, window_bounds = array<i64: 64, 128>}, {pipeline_mode = #tpu.pipeline_mode<synchronous>, transform_indices = @transform_3, window_bounds = array<i64: 64, 128>}, {pipeline_mode = #tpu.pipeline_mode<synchronous>, transform_indices = @transform_4, window_bounds = array<i64: 1, 128>}, {transform_indices = @transform_5, window_bounds = array<i64: 1, 1, 128>}]} {
    %0 = arith.index_cast %arg0 : i32 to index
    %1 = memref.load %arg1[%0] : memref<4xi32, #tpu.memory_space<smem>>
    %2 = arith.index_cast %arg0 : i32 to index
    %3 = memref.load %arg2[%2] : memref<4xi32, #tpu.memory_space<smem>>
    %c0 = arith.constant 0 : index
    %4 = memref.load %arg3[%c0] : memref<1xi32, #tpu.memory_space<smem>>
    %c0_0 = arith.constant 0 : index
    %c0_1 = arith.constant 0 : index
    %c0_2 = arith.constant 0 : index
    %5 = vector.load %arg4[%c0_0, %c0_1, %c0_2] : memref<1x8x64xf32, #tpu.memory_space<vmem>>, vector<1x8x64xf32>
    %6 = vector.shape_cast %5 : vector<1x8x64xf32> to vector<8x64xf32>
    %c0_3 = arith.constant 0 : index
    %c0_4 = arith.constant 0 : index
    %7 = vector.load %arg6[%c0_3, %c0_4] : memref<64x128xf32, #tpu.memory_space<vmem>>, vector<64x128xf32>
    %cst = arith.constant dense<0.000000e+00> : vector<8x128xf32>
    %8 = tpu.matmul %6, %7, %cst {dimension_numbers = #tpu.dot_dimension_numbers<[1], [0], [0], [1], [0, 0, 1, 1], [], []>} : vector<8x64xf32>, vector<64x128xf32>, vector<8x128xf32> -> vector<8x128xf32>
    %c0_5 = arith.constant 0 : index
    %c0_6 = arith.constant 0 : index
    %c0_7 = arith.constant 0 : index
    %9 = vector.load %arg5[%c0_5, %c0_6, %c0_7] : memref<1x8x64xf32, #tpu.memory_space<vmem>>, vector<1x8x64xf32>
    %10 = vector.shape_cast %9 : vector<1x8x64xf32> to vector<8x64xf32>
    %c0_8 = arith.constant 0 : index
    %c0_9 = arith.constant 0 : index
    %11 = vector.load %arg7[%c0_8, %c0_9] : memref<64x128xf32, #tpu.memory_space<vmem>>, vector<64x128xf32>
    %cst_10 = arith.constant dense<0.000000e+00> : vector<8x128xf32>
    %12 = tpu.matmul %10, %11, %cst_10 {dimension_numbers = #tpu.dot_dimension_numbers<[1], [0], [0], [1], [0, 0, 1, 1], [], []>} : vector<8x64xf32>, vector<64x128xf32>, vector<8x128xf32> -> vector<8x128xf32>
    %c0_11 = arith.constant 0 : index
    %c0_12 = arith.constant 0 : index
    %13 = vector.load %arg8[%c0_11, %c0_12] : memref<1x128xf32, #tpu.memory_space<vmem>>, vector<1x128xf32>
    %14 = vector.broadcast %13 : vector<1x128xf32> to vector<8x128xf32>
    %15 = arith.addf %12, %14 : vector<8x128xf32>
    %16 = tpu.iota {dimensions = array<i32: 0>} : vector<8x1xi32>
    %17 = vector.broadcast %3 : i32 to vector<8x1xi32>
    %18 = arith.cmpi slt, %16, %17 : vector<8x1xi32>
    %19 = arith.extui %18 : vector<8x1xi1> to vector<8x1xi32>
    %20 = arith.sitofp %19 : vector<8x1xi32> to vector<8x1xf32>
    %cst_13 = arith.constant 0.000000e+00 : f32
    %21 = vector.broadcast %cst_13 : f32 to vector<1x128xf32>
    %22 = vector.extract_strided_slice %8 {offsets = [0, 0], sizes = [1, 128], strides = [1, 1]} : vector<8x128xf32> to vector<1x128xf32>
    %23 = vector.broadcast %22 : vector<1x128xf32> to vector<8x128xf32>
    %24 = arith.addf %23, %15 : vector<8x128xf32>
    %cst_14 = arith.constant 0.000000e+00 : f32
    %25 = vector.broadcast %cst_14 : f32 to vector<8x128xf32>
    %26 = arith.maximumf %24, %25 : vector<8x128xf32>
    %27 = vector.broadcast %20 : vector<8x1xf32> to vector<8x128xf32>
    %28 = arith.mulf %26, %27 : vector<8x128xf32>
    %c0_i32 = arith.constant 0 : i32
    %29 = arith.cmpi sgt, %1, %c0_i32 : i32
    %30 = arith.extui %29 : i1 to i32
    %31 = arith.sitofp %30 : i32 to f32
    %cst_15 = arith.constant dense<0.000000e+00> : vector<128xf32>
    %32 = vector.multi_reduction <add>, %28, %cst_15 [0] : vector<8x128xf32> to vector<128xf32>
    %33 = vector.shape_cast %32 : vector<128xf32> to vector<1x128xf32>
    %34 = vector.broadcast %31 : f32 to vector<1x128xf32>
    %35 = arith.mulf %34, %33 : vector<1x128xf32>
    %36 = arith.addf %21, %35 : vector<1x128xf32>
    %37 = vector.extract_strided_slice %8 {offsets = [1, 0], sizes = [1, 128], strides = [1, 1]} : vector<8x128xf32> to vector<1x128xf32>
    %38 = vector.broadcast %37 : vector<1x128xf32> to vector<8x128xf32>
    %39 = arith.addf %38, %15 : vector<8x128xf32>
    %cst_16 = arith.constant 0.000000e+00 : f32
    %40 = vector.broadcast %cst_16 : f32 to vector<8x128xf32>
    %41 = arith.maximumf %39, %40 : vector<8x128xf32>
    %42 = vector.broadcast %20 : vector<8x1xf32> to vector<8x128xf32>
    %43 = arith.mulf %41, %42 : vector<8x128xf32>
    %c1_i32 = arith.constant 1 : i32
    %44 = arith.cmpi sgt, %1, %c1_i32 : i32
    %45 = arith.extui %44 : i1 to i32
    %46 = arith.sitofp %45 : i32 to f32
    %cst_17 = arith.constant dense<0.000000e+00> : vector<128xf32>
    %47 = vector.multi_reduction <add>, %43, %cst_17 [0] : vector<8x128xf32> to vector<128xf32>
    %48 = vector.shape_cast %47 : vector<128xf32> to vector<1x128xf32>
    %49 = vector.broadcast %46 : f32 to vector<1x128xf32>
    %50 = arith.mulf %49, %48 : vector<1x128xf32>
    %51 = arith.addf %36, %50 : vector<1x128xf32>
    %52 = vector.extract_strided_slice %8 {offsets = [2, 0], sizes = [1, 128], strides = [1, 1]} : vector<8x128xf32> to vector<1x128xf32>
    %53 = vector.broadcast %52 : vector<1x128xf32> to vector<8x128xf32>
    %54 = arith.addf %53, %15 : vector<8x128xf32>
    %cst_18 = arith.constant 0.000000e+00 : f32
    %55 = vector.broadcast %cst_18 : f32 to vector<8x128xf32>
    %56 = arith.maximumf %54, %55 : vector<8x128xf32>
    %57 = vector.broadcast %20 : vector<8x1xf32> to vector<8x128xf32>
    %58 = arith.mulf %56, %57 : vector<8x128xf32>
    %c2_i32 = arith.constant 2 : i32
    %59 = arith.cmpi sgt, %1, %c2_i32 : i32
    %60 = arith.extui %59 : i1 to i32
    %61 = arith.sitofp %60 : i32 to f32
    %cst_19 = arith.constant dense<0.000000e+00> : vector<128xf32>
    %62 = vector.multi_reduction <add>, %58, %cst_19 [0] : vector<8x128xf32> to vector<128xf32>
    %63 = vector.shape_cast %62 : vector<128xf32> to vector<1x128xf32>
    %64 = vector.broadcast %61 : f32 to vector<1x128xf32>
    %65 = arith.mulf %64, %63 : vector<1x128xf32>
    %66 = arith.addf %51, %65 : vector<1x128xf32>
    %67 = vector.extract_strided_slice %8 {offsets = [3, 0], sizes = [1, 128], strides = [1, 1]} : vector<8x128xf32> to vector<1x128xf32>
    %68 = vector.broadcast %67 : vector<1x128xf32> to vector<8x128xf32>
    %69 = arith.addf %68, %15 : vector<8x128xf32>
    %cst_20 = arith.constant 0.000000e+00 : f32
    %70 = vector.broadcast %cst_20 : f32 to vector<8x128xf32>
    %71 = arith.maximumf %69, %70 : vector<8x128xf32>
    %72 = vector.broadcast %20 : vector<8x1xf32> to vector<8x128xf32>
    %73 = arith.mulf %71, %72 : vector<8x128xf32>
    %c3_i32 = arith.constant 3 : i32
    %74 = arith.cmpi sgt, %1, %c3_i32 : i32
    %75 = arith.extui %74 : i1 to i32
    %76 = arith.sitofp %75 : i32 to f32
    %cst_21 = arith.constant dense<0.000000e+00> : vector<128xf32>
    %77 = vector.multi_reduction <add>, %73, %cst_21 [0] : vector<8x128xf32> to vector<128xf32>
    %78 = vector.shape_cast %77 : vector<128xf32> to vector<1x128xf32>
    %79 = vector.broadcast %76 : f32 to vector<1x128xf32>
    %80 = arith.mulf %79, %78 : vector<1x128xf32>
    %81 = arith.addf %66, %80 : vector<1x128xf32>
    %82 = vector.extract_strided_slice %8 {offsets = [4, 0], sizes = [1, 128], strides = [1, 1]} : vector<8x128xf32> to vector<1x128xf32>
    %83 = vector.broadcast %82 : vector<1x128xf32> to vector<8x128xf32>
    %84 = arith.addf %83, %15 : vector<8x128xf32>
    %cst_22 = arith.constant 0.000000e+00 : f32
    %85 = vector.broadcast %cst_22 : f32 to vector<8x128xf32>
    %86 = arith.maximumf %84, %85 : vector<8x128xf32>
    %87 = vector.broadcast %20 : vector<8x1xf32> to vector<8x128xf32>
    %88 = arith.mulf %86, %87 : vector<8x128xf32>
    %c4_i32 = arith.constant 4 : i32
    %89 = arith.cmpi sgt, %1, %c4_i32 : i32
    %90 = arith.extui %89 : i1 to i32
    %91 = arith.sitofp %90 : i32 to f32
    %cst_23 = arith.constant dense<0.000000e+00> : vector<128xf32>
    %92 = vector.multi_reduction <add>, %88, %cst_23 [0] : vector<8x128xf32> to vector<128xf32>
    %93 = vector.shape_cast %92 : vector<128xf32> to vector<1x128xf32>
    %94 = vector.broadcast %91 : f32 to vector<1x128xf32>
    %95 = arith.mulf %94, %93 : vector<1x128xf32>
    %96 = arith.addf %81, %95 : vector<1x128xf32>
    %97 = vector.extract_strided_slice %8 {offsets = [5, 0], sizes = [1, 128], strides = [1, 1]} : vector<8x128xf32> to vector<1x128xf32>
    %98 = vector.broadcast %97 : vector<1x128xf32> to vector<8x128xf32>
    %99 = arith.addf %98, %15 : vector<8x128xf32>
    %cst_24 = arith.constant 0.000000e+00 : f32
    %100 = vector.broadcast %cst_24 : f32 to vector<8x128xf32>
    %101 = arith.maximumf %99, %100 : vector<8x128xf32>
    %102 = vector.broadcast %20 : vector<8x1xf32> to vector<8x128xf32>
    %103 = arith.mulf %101, %102 : vector<8x128xf32>
    %c5_i32 = arith.constant 5 : i32
    %104 = arith.cmpi sgt, %1, %c5_i32 : i32
    %105 = arith.extui %104 : i1 to i32
    %106 = arith.sitofp %105 : i32 to f32
    %cst_25 = arith.constant dense<0.000000e+00> : vector<128xf32>
    %107 = vector.multi_reduction <add>, %103, %cst_25 [0] : vector<8x128xf32> to vector<128xf32>
    %108 = vector.shape_cast %107 : vector<128xf32> to vector<1x128xf32>
    %109 = vector.broadcast %106 : f32 to vector<1x128xf32>
    %110 = arith.mulf %109, %108 : vector<1x128xf32>
    %111 = arith.addf %96, %110 : vector<1x128xf32>
    %112 = vector.extract_strided_slice %8 {offsets = [6, 0], sizes = [1, 128], strides = [1, 1]} : vector<8x128xf32> to vector<1x128xf32>
    %113 = vector.broadcast %112 : vector<1x128xf32> to vector<8x128xf32>
    %114 = arith.addf %113, %15 : vector<8x128xf32>
    %cst_26 = arith.constant 0.000000e+00 : f32
    %115 = vector.broadcast %cst_26 : f32 to vector<8x128xf32>
    %116 = arith.maximumf %114, %115 : vector<8x128xf32>
    %117 = vector.broadcast %20 : vector<8x1xf32> to vector<8x128xf32>
    %118 = arith.mulf %116, %117 : vector<8x128xf32>
    %c6_i32 = arith.constant 6 : i32
    %119 = arith.cmpi sgt, %1, %c6_i32 : i32
    %120 = arith.extui %119 : i1 to i32
    %121 = arith.sitofp %120 : i32 to f32
    %cst_27 = arith.constant dense<0.000000e+00> : vector<128xf32>
    %122 = vector.multi_reduction <add>, %118, %cst_27 [0] : vector<8x128xf32> to vector<128xf32>
    %123 = vector.shape_cast %122 : vector<128xf32> to vector<1x128xf32>
    %124 = vector.broadcast %121 : f32 to vector<1x128xf32>
    %125 = arith.mulf %124, %123 : vector<1x128xf32>
    %126 = arith.addf %111, %125 : vector<1x128xf32>
    %127 = vector.extract_strided_slice %8 {offsets = [7, 0], sizes = [1, 128], strides = [1, 1]} : vector<8x128xf32> to vector<1x128xf32>
    %128 = vector.broadcast %127 : vector<1x128xf32> to vector<8x128xf32>
    %129 = arith.addf %128, %15 : vector<8x128xf32>
    %cst_28 = arith.constant 0.000000e+00 : f32
    %130 = vector.broadcast %cst_28 : f32 to vector<8x128xf32>
    %131 = arith.maximumf %129, %130 : vector<8x128xf32>
    %132 = vector.broadcast %20 : vector<8x1xf32> to vector<8x128xf32>
    %133 = arith.mulf %131, %132 : vector<8x128xf32>
    %c7_i32 = arith.constant 7 : i32
    %134 = arith.cmpi sgt, %1, %c7_i32 : i32
    %135 = arith.extui %134 : i1 to i32
    %136 = arith.sitofp %135 : i32 to f32
    %cst_29 = arith.constant dense<0.000000e+00> : vector<128xf32>
    %137 = vector.multi_reduction <add>, %133, %cst_29 [0] : vector<8x128xf32> to vector<128xf32>
    %138 = vector.shape_cast %137 : vector<128xf32> to vector<1x128xf32>
    %139 = vector.broadcast %136 : f32 to vector<1x128xf32>
    %140 = arith.mulf %139, %138 : vector<1x128xf32>
    %141 = arith.addf %126, %140 : vector<1x128xf32>
    %142 = arith.muli %1, %3 : i32
    %143 = arith.subi %4, %142 : i32
    %144 = arith.sitofp %143 : i32 to f32
    %c0_30 = arith.constant 0 : index
    %c0_31 = arith.constant 0 : index
    %145 = vector.load %arg8[%c0_30, %c0_31] : memref<1x128xf32, #tpu.memory_space<vmem>>, vector<1x128xf32>
    %cst_32 = arith.constant 0.000000e+00 : f32
    %146 = vector.broadcast %cst_32 : f32 to vector<1x128xf32>
    %147 = arith.maximumf %145, %146 : vector<1x128xf32>
    %148 = vector.broadcast %144 : f32 to vector<1x128xf32>
    %149 = arith.mulf %148, %147 : vector<1x128xf32>
    %150 = arith.addf %141, %149 : vector<1x128xf32>
    %151 = arith.sitofp %142 : i32 to f32
    %152 = vector.broadcast %151 : f32 to vector<1x128xf32>
    %153 = arith.divf %150, %152 : vector<1x128xf32>
    %c0_33 = arith.constant 0 : index
    %c0_34 = arith.constant 0 : index
    %c0_35 = arith.constant 0 : index
    %154 = vector.load %arg9[%c0_33, %c0_34, %c0_35] : memref<1x1x128xf32, #tpu.memory_space<vmem>>, vector<1x1x128xf32>
    %155 = vector.shape_cast %154 : vector<1x1x128xf32> to vector<1x128xf32>
    %156 = vector.shape_cast %153 : vector<1x128xf32> to vector<1x1x128xf32>
    tpu.vector_store %arg9[%c0_33, %c0_34, %c0_35], %156 {strides = array<i32>} : memref<1x1x128xf32, #tpu.memory_space<vmem>>, vector<1x1x128xf32>,
    return
  }
  func.func @transform_0(%arg0: i32, %arg1: memref<4xi32, #tpu.memory_space<smem>>, %arg2: memref<4xi32, #tpu.memory_space<smem>>, %arg3: memref<1xi32, #tpu.memory_space<smem>>) -> (i32, i32, i32) {
    %c0_i32 = arith.constant 0 : i32
    %c0_i32_0 = arith.constant 0 : i32
    %c0_i32_1 = arith.constant 0 : i32
    return %arg0, %c0_i32, %c0_i32_0 : i32, i32, i32
  }
  func.func @transform_1(%arg0: i32, %arg1: memref<4xi32, #tpu.memory_space<smem>>, %arg2: memref<4xi32, #tpu.memory_space<smem>>, %arg3: memref<1xi32, #tpu.memory_space<smem>>) -> (i32, i32, i32) {
    %c0_i32 = arith.constant 0 : i32
    %c0_i32_0 = arith.constant 0 : i32
    %c0_i32_1 = arith.constant 0 : i32
    return %arg0, %c0_i32, %c0_i32_0 : i32, i32, i32
  }
  func.func @transform_2(%arg0: i32, %arg1: memref<4xi32, #tpu.memory_space<smem>>, %arg2: memref<4xi32, #tpu.memory_space<smem>>, %arg3: memref<1xi32, #tpu.memory_space<smem>>) -> (i32, i32) {
    %c0_i32 = arith.constant 0 : i32
    %c0_i32_0 = arith.constant 0 : i32
    %c0_i32_1 = arith.constant 0 : i32
    return %c0_i32, %c0_i32_0 : i32, i32
  }
  func.func @transform_3(%arg0: i32, %arg1: memref<4xi32, #tpu.memory_space<smem>>, %arg2: memref<4xi32, #tpu.memory_space<smem>>, %arg3: memref<1xi32, #tpu.memory_space<smem>>) -> (i32, i32) {
    %c0_i32 = arith.constant 0 : i32
    %c0_i32_0 = arith.constant 0 : i32
    %c0_i32_1 = arith.constant 0 : i32
    return %c0_i32, %c0_i32_0 : i32, i32
  }
  func.func @transform_4(%arg0: i32, %arg1: memref<4xi32, #tpu.memory_space<smem>>, %arg2: memref<4xi32, #tpu.memory_space<smem>>, %arg3: memref<1xi32, #tpu.memory_space<smem>>) -> (i32, i32) {
    %c0_i32 = arith.constant 0 : i32
    %c0_i32_0 = arith.constant 0 : i32
    %c0_i32_1 = arith.constant 0 : i32
    return %c0_i32, %c0_i32_0 : i32, i32
  }
  func.func @transform_5(%arg0: i32, %arg1: memref<4xi32, #tpu.memory_space<smem>>, %arg2: memref<4xi32, #tpu.memory_space<smem>>, %arg3: memref<1xi32, #tpu.memory_space<smem>>) -> (i32, i32, i32) {
    %c0_i32 = arith.constant 0 : i32
    %c0_i32_0 = arith.constant 0 : i32
    %c0_i32_1 = arith.constant 0 : i32
    return %arg0, %c0_i32, %c0_i32_0 : i32, i32, i32
  }
}

</mosaic_0001>

<llo_original>
// kernel: relational_net_forward.1
$region0: #{relational_net_forward.1}
  #allocation0 [shape = 'u32[]', space=smem, size = 0x4, offset = 0x4, fixed_abs, tag = 'smem constant byte address 0x4 - core index']
  #allocation1 [shape = 'u32[72,128]{1,0:T(1,128)}', space=vmem, size = 0x9000, scoped, tag = 'internal scratch']
  #allocation2 [shape = 's32[1]{0}', space=sflag, size = 0x4, scoped, tag = 'scoped memory for relational_net_forward.1']
  #allocation3 [shape = 'u8[512]{0}', space=smem, size = 0x200, scoped, tag = 'prefetched SMEM operand 0']
  #allocation4 [shape = 'u8[512]{0}', space=smem, size = 0x200, scoped, tag = 'prefetched SMEM operand 1']
  #allocation5 [shape = 's32[1]{0:T(128)S(6)}', space=smem, size = 0x200, scoped, tag = 'prefetched SMEM operand 2']
  %s0 = inlined_call_operand.vmem [shape: s32[4], index: 0, kind: input, shape index: {}]
  %s1 = inlined_call_operand.vmem [shape: s32[4], index: 1, kind: input, shape index: {}]
  %s2 = inlined_call_operand.<no memory space> [shape: s32[1], index: 2, kind: input, shape index: {}]
  %s3 = inlined_call_operand.vmem [shape: f32[4,8,64], index: 3, kind: input, shape index: {}]
  %s4 = inlined_call_operand.vmem [shape: f32[4,8,64], index: 4, kind: input, shape index: {}]
  %s5 = inlined_call_operand.vmem [shape: f32[64,128], index: 5, kind: input, shape index: {}]
  %s6 = inlined_call_operand.vmem [shape: f32[64,128], index: 6, kind: input, shape index: {}]
  %s7 = inlined_call_operand.vmem [shape: f32[1,128], index: 7, kind: input, shape index: {}]
  %s8 = inlined_call_operand.hbm [shape: f32[4,1,128], index: 8, kind: output, shape index: {}]
  %s9 = sld [smem:[#allocation0]]
  $region53: #{relational_net_forward.1} parent=0
    _
  %s11 = ssub.s32 1, %s9
  %s12 = scalar_select 0, %s11, %s9
  %s14 = sshll.u32 %s0, 4
  %s15 = int_to_ptr.vmem [resolvable:$true] %s14
  %17 = dma.vmem_to_smem %s15, 16, [#allocation3], [#allocation2]
  %s19 = sshll.u32 %s1, 4
  %s20 = int_to_ptr.vmem [resolvable:$true] %s19
  %22 = dma.vmem_to_smem %s20, 16, [#allocation4], [#allocation2]
  %23 = sst [smem:[#allocation5]] %s2
  %25 = dma.done [#allocation2], 32
  %26 = sfence
  $region1: #{relational_net_forward.1} parent=0
    #allocation6 [shape = 'u8[1024]{0}', space=vmem, size = 0x400, scoped, tag = 'output window, operand 0']
    #allocation7 [shape = 's32[2]{0}', space=sflag, size = 0x8, scoped, tag = 'scoped memory for relational_net_forward.1']
    %27 = vsyncpa [#allocation7], 0
    %s28 = scalar_lea.sflag [#allocation7], 1
    %29 = vsyncpa %s28, 0
    loop: start=0, step=1, limit=6
    $region2: #{relational_net_forward.1} parent=1 // loop_pre_header
      _
    $region3: #{relational_net_forward.1} parent=1 // loop_header
      %s31 = sphi 0, %s35
      %p32 = scmp.ge.s32.totalorder %s31, 6
      %s41 = sphi 0, %s43
      %s44 = sphi 0, %s41
      %s45 = sphi 0, %s44
      %s61 = sphi 0, %s45
      %s67 = sphi 0, %s69
      %s70 = sphi 0, %s67
      %s71 = sphi 0, %s70
      %s87 = sphi 0, %s71
      %s91 = sphi 0, %s91
      %s93 = sphi 0, %s91
      %s94 = sphi 0, %s93
      %s108 = sphi 0, %s94
      %s112 = sphi 0, %s112
      %s114 = sphi 0, %s112
      %s115 = sphi 0, %s114
      %s129 = sphi 0, %s115
      %s133 = sphi 0, %s133
      %s135 = sphi 0, %s133
      %s136 = sphi 0, %s135
      %s150 = sphi 0, %s136
      %s156 = sphi 0, %s158
      %s159 = sphi 0, %s156
      %s160 = sphi 0, %s159
      %s176 = sphi 0, %s160
    $region4: #{relational_net_forward.1} parent=1 // loop_header_branch
      %34 = sbr.rel (%p32) target = $region8
    $region5: #{relational_net_forward.1} parent=1 // loop_body
      %s36 = ssub.s32 %s31, 1
      %s37 = ssub.s32 %s31, 2
      %s38 = sadd.s32 %s31, 1
      %s39 = ssub.s32 %s31, %s38
      %p40 = scmp.eq.s32.totalorder %s39, 0
      %s42 = sadd.s32 %s41, 1
      %s43 = scalar_select %p40, %s41, %s42
      %p46 = pneg %p40
      %p47 = scmp.eq.s32.totalorder %s31, 3
      %p48 = por %p46, %p47
      %p49 = scmp.ne.s32.totalorder %s41, %s44
      %p50 = scmp.eq.s32.totalorder %s31, 0
      %p51 = por %p49, %p50
      %p52 = scmp.ne.s32.totalorder %s41, %s44
      %p53 = scmp.eq.s32.totalorder %s36, 3
      %p54 = por %p52, %p53
      %p55 = scmp.ne.s32.totalorder %s44, %s45
      %p56 = scmp.eq.s32.totalorder %s36, 0
      %p57 = por %p55, %p56
      %p58 = scmp.ne.s32.totalorder %s44, %s45
      %p59 = scmp.eq.s32.totalorder %s37, 3
      %p60 = por %p58, %p59
      %p62 = scmp.ne.s32.totalorder %s45, %s61
      %p63 = scmp.eq.s32.totalorder %s37, 0
      %p64 = por %p62, %p63
      %s65 = ssub.s32 %s31, %s38
      %p66 = scmp.eq.s32.totalorder %s65, 0
      %s68 = sadd.s32 %s67, 1
      %s69 = scalar_select %p66, %s67, %s68
      %p72 = pneg %p66
      %p73 = scmp.eq.s32.totalorder %s31, 3
      %p74 = por %p72, %p73
      %p75 = scmp.ne.s32.totalorder %s67, %s70
      %p76 = scmp.eq.s32.totalorder %s31, 0
      %p77 = por %p75, %p76
      %p78 = scmp.ne.s32.totalorder %s67, %s70
      %p79 = scmp.eq.s32.totalorder %s36, 3
      %p80 = por %p78, %p79
      %p81 = scmp.ne.s32.totalorder %s70, %s71
      %p82 = scmp.eq.s32.totalorder %s36, 0
      %p83 = por %p81, %p82
      %p84 = scmp.ne.s32.totalorder %s70, %s71
      %p85 = scmp.eq.s32.totalorder %s37, 3
      %p86 = por %p84, %p85
      %p88 = scmp.ne.s32.totalorder %s71, %s87
      %p89 = scmp.eq.s32.totalorder %s37, 0
      %p90 = por %p88, %p89
      %s92 = sadd.s32 %s91, 1
      %p95 = scmp.eq.s32.totalorder %s31, 3
      %p96 = scmp.ne.s32.totalorder %s91, %s93
      %p97 = scmp.eq.s32.totalorder %s31, 0
      %p98 = por %p96, %p97
      %p99 = scmp.ne.s32.totalorder %s91, %s93
      %p100 = scmp.eq.s32.totalorder %s36, 3
      %p101 = por %p99, %p100
      %p102 = scmp.ne.s32.totalorder %s93, %s94
      %p103 = scmp.eq.s32.totalorder %s36, 0
      %p104 = por %p102, %p103
      %p105 = scmp.ne.s32.totalorder %s93, %s94
      %p106 = scmp.eq.s32.totalorder %s37, 3
      %p107 = por %p105, %p106
      %p109 = scmp.ne.s32.totalorder %s94, %s108
      %p110 = scmp.eq.s32.totalorder %s37, 0
      %p111 = por %p109, %p110
      %s113 = sadd.s32 %s112, 1
      %p116 = scmp.eq.s32.totalorder %s31, 3
      %p117 = scmp.ne.s32.totalorder %s112, %s114
      %p118 = scmp.eq.s32.totalorder %s31, 0
      %p119 = por %p117, %p118
      %p120 = scmp.ne.s32.totalorder %s112, %s114
      %p121 = scmp.eq.s32.totalorder %s36, 3
      %p122 = por %p120, %p121
      %p123 = scmp.ne.s32.totalorder %s114, %s115
      %p124 = scmp.eq.s32.totalorder %s36, 0
      %p125 = por %p123, %p124
      %p126 = scmp.ne.s32.totalorder %s114, %s115
      %p127 = scmp.eq.s32.totalorder %s37, 3
      %p128 = por %p126, %p127
      %p130 = scmp.ne.s32.totalorder %s115, %s129
      %p131 = scmp.eq.s32.totalorder %s37, 0
      %p132 = por %p130, %p131
      %s134 = sadd.s32 %s133, 1
      %p137 = scmp.eq.s32.totalorder %s31, 3
      %p138 = scmp.ne.s32.totalorder %s133, %s135
      %p139 = scmp.eq.s32.totalorder %s31, 0
      %p140 = por %p138, %p139
      %p141 = scmp.ne.s32.totalorder %s133, %s135
      %p142 = scmp.eq.s32.totalorder %s36, 3
      %p143 = por %p141, %p142
      %p144 = scmp.ne.s32.totalorder %s135, %s136
      %p145 = scmp.eq.s32.totalorder %s36, 0
      %p146 = por %p144, %p145
      %p147 = scmp.ne.s32.totalorder %s135, %s136
      %p148 = scmp.eq.s32.totalorder %s37, 3
      %p149 = por %p147, %p148
      %p151 = scmp.ne.s32.totalorder %s136, %s150
      %p152 = scmp.eq.s32.totalorder %s37, 0
      %p153 = por %p151, %p152
      %s154 = ssub.s32 %s31, %s38
      %p155 = scmp.eq.s32.totalorder %s154, 0
      %s157 = sadd.s32 %s156, 1
      %s158 = scalar_select %p155, %s156, %s157
      %p161 = pneg %p155
      %p162 = scmp.eq.s32.totalorder %s31, 3
      %p163 = por %p161, %p162
      %p164 = scmp.ne.s32.totalorder %s156, %s159
      %p165 = scmp.eq.s32.totalorder %s31, 0
      %p166 = por %p164, %p165
      %p167 = scmp.ne.s32.totalorder %s156, %s159
      %p168 = scmp.eq.s32.totalorder %s36, 3
      %p169 = por %p167, %p168
      %p170 = scmp.ne.s32.totalorder %s159, %s160
      %p171 = scmp.eq.s32.totalorder %s36, 0
      %p172 = por %p170, %p171
      %p173 = scmp.ne.s32.totalorder %s159, %s160
      %p174 = scmp.eq.s32.totalorder %s37, 3
      %p175 = por %p173, %p174
      %p177 = scmp.ne.s32.totalorder %s160, %s176
      %p178 = scmp.eq.s32.totalorder %s37, 0
      %p179 = por %p177, %p178
      %p180 = scmp.le.s32.totalorder 1, %s31
      %p181 = scmp.lt.s32.totalorder %s31, 5
      %p182 = pnand %p180, %p181
      %p183 = pneg %p182
      // Predicated region
      $region9: #{relational_net_forward.1} parent=5 // pred_check
        _
      $region10: #{relational_net_forward.1} parent=5 // pred_check_branch
        %185 = sbr.rel (%p182) target = $region12
      $region11: #{relational_net_forward.1} parent=5 // pred_region
        %s186 = ssub.s32 %s31, 1
        // Predicated region
        $region13: #{relational_net_forward.1} parent=11 // pred_check
          %p187 = pneg %p104
        $region14: #{relational_net_forward.1} parent=11 // pred_check_branch
          %189 = sbr.rel (%p187) target = $region16
        $region15: #{relational_net_forward.1} parent=11 // pred_region
          _
        $region16: #{relational_net_forward.1} parent=11 // pred_fallthru
          _
        // Predicated region
        $region17: #{relational_net_forward.1} parent=11 // pred_check
          %p190 = pneg %p125
        $region18: #{relational_net_forward.1} parent=11 // pred_check_branch
          %192 = sbr.rel (%p190) target = $region20
        $region19: #{relational_net_forward.1} parent=11 // pred_region
          _
        $region20: #{relational_net_forward.1} parent=11 // pred_fallthru
          _
        // Predicated region
        $region21: #{relational_net_forward.1} parent=11 // pred_check
          %p193 = pneg %p146
        $region22: #{relational_net_forward.1} parent=11 // pred_check_branch
          %195 = sbr.rel (%p193) target = $region24
        $region23: #{relational_net_forward.1} parent=11 // pred_region
          _
        $region24: #{relational_net_forward.1} parent=11 // pred_fallthru
          _
      $region12: #{relational_net_forward.1} parent=5 // pred_fallthru
        _
      %p196 = scmp.lt.s32.totalorder %s31, 4
      // Predicated region
      $region25: #{relational_net_forward.1} parent=5 // pred_check
        %p197 = pneg %p196
      $region26: #{relational_net_forward.1} parent=5 // pred_check_branch
        %199 = sbr.rel (%p197) target = $region28
      $region27: #{relational_net_forward.1} parent=5 // pred_region
        // Predicated region
        $region29: #{relational_net_forward.1} parent=27 // pred_check
          %p200 = pneg %p51
        $region30: #{relational_net_forward.1} parent=27 // pred_check_branch
          %202 = sbr.rel (%p200) target = $region32
        $region31: #{relational_net_forward.1} parent=27 // pred_region
          %p203 = scmp.lt.s32.totalorder %s31, 3
          %s204 = scalar_select %p203, %s31, 3
          %s205 = smul.addr %s204, 8
          %s206 = scalar_lea.vmem %s3, %s205
        $region32: #{relational_net_forward.1} parent=27 // pred_fallthru
          _
        // Predicated region
        $region33: #{relational_net_forward.1} parent=27 // pred_check
          %p207 = pneg %p77
        $region34: #{relational_net_forward.1} parent=27 // pred_check_branch
          %209 = sbr.rel (%p207) target = $region36
        $region35: #{relational_net_forward.1} parent=27 // pred_region
          %p210 = scmp.lt.s32.totalorder %s31, 3
          %s211 = scalar_select %p210, %s31, 3
          %s212 = smul.addr %s211, 8
          %s213 = scalar_lea.vmem %s4, %s212
        $region36: #{relational_net_forward.1} parent=27 // pred_fallthru
          _
      $region28: #{relational_net_forward.1} parent=5 // pred_fallthru
        _
      %p214 = scmp.le.s32.totalorder 1, %s31
      %p215 = scmp.lt.s32.totalorder %s31, 5
      %p216 = pnand %p214, %p215
      %p217 = pneg %p216
      // Predicated region
      $region37: #{relational_net_forward.1} parent=5 // pred_check
        _
      $region38: #{relational_net_forward.1} parent=5 // pred_check_branch
        %219 = sbr.rel (%p216) target = $region40
      $region39: #{relational_net_forward.1} parent=5 // pred_region
        %s220 = ssub.s32 %s31, 1
        %p221 = scmp.lt.s32.totalorder %s36, 3
        %s222 = scalar_select %p221, %s36, 3
        %s223 = smul.addr %s222, 8
        %s224 = scalar_lea.vmem %s3, %s223
        %p225 = pneg %p57
        %p226 = pneg %p54
        %p227 = scmp.lt.s32.totalorder %s36, 3
        %s228 = scalar_select %p227, %s36, 3
        %s229 = smul.addr %s228, 8
        %s230 = scalar_lea.vmem %s4, %s229
        %p231 = pneg %p83
        %p232 = pneg %p80
        %p233 = pneg %p104
        %p234 = pneg %p101
        %p235 = pneg %p125
        %p236 = pneg %p122
        %p237 = pneg %p146
        %p238 = pneg %p143
        %p239 = pneg %p172
        %p240 = pneg %p169
        %s241 = sand.u32 %s159, 1
        %s242 = scalar_lea.sflag [#allocation7], %s241
        %s243 = sand.u32 %s159, 1
        %s244 = scalar_lea.vmem [#allocation6], %s243
        %p245 = scmp.lt.s32.totalorder %s36, 3
        %s246 = scalar_select %p245, %s36, 3
        %s247 = smul.addr %s246, 8
        %s248 = scalar_lea.vmem %s3, %s247
        %p249 = scmp.lt.s32.totalorder %s36, 3
        %s250 = scalar_select %p249, %s36, 3
        %s251 = smul.addr %s250, 8
        %s252 = scalar_lea.vmem %s4, %s251
        %s253 = sld [smem:[#allocation3 + %s36]]
        %s254 = sld [smem:[#allocation4 + %s36]]
        %s255 = sld [smem:[#allocation5]]
        %v256 = vld [vmem:[%s248] sm:$0xff]
        %v257 = vld [vmem:[%s5] sm:$0xff]
        %v258 = vld [vmem:[%s5 + $0x8] sm:$0xff]
        %v259 = vld [vmem:[%s5 + $0x10] sm:$0xff]
        %v260 = vld [vmem:[%s5 + $0x18] sm:$0xff]
        %v261 = vld [vmem:[%s5 + $0x20] sm:$0xff]
        %v262 = vld [vmem:[%s5 + $0x28] sm:$0xff]
        %v263 = vld [vmem:[%s5 + $0x30] sm:$0xff]
        %v264 = vld [vmem:[%s5 + $0x38] sm:$0xff]
        %vm265 = vcmask 523264
        %v267 = vsel %vm265, %v256, 0
        %269 = vmatpush.msra.mxu0 0.0
        %270 = vmatpush.msra.mxu0 0.0
        %271 = vmatpush.msra.mxu0 0.0
        %272 = vmatpush.msra.mxu0 0.0
        %273 = vmatpush.msra.mxu0 0.0
        %274 = vmatpush.msra.mxu0 0.0
        %275 = vmatpush.msra.mxu0 0.0
        %276 = vmatpush.msra.mxu0 0.0
        %277 = vmatpush.msra.mxu0 %v264
        %278 = vmatpush.msra.mxu0 %v263
        %279 = vmatpush.msra.mxu0 %v262
        %280 = vmatpush.msra.mxu0 %v261
        %281 = vmatpush.msra.mxu0 %v260
        %282 = vmatpush.msra.mxu0 %v259
        %283 = vmatpush.msra.mxu0 %v258
        %284 = vmatpush.msra.mxu0 %v257
        %285 = vmatmul.f32.gmra.mxu0 %v267
        %v286 = vpop.f32.mrf.mxu0
        %v287 = vadd.f32 0.0, %v286
        %288 = vdwg.mxu0
        %v289 = vld [vmem:[%s252] sm:$0xff]
        %v290 = vld [vmem:[%s6] sm:$0xff]
        %v291 = vld [vmem:[%s6 + $0x8] sm:$0xff]
        %v292 = vld [vmem:[%s6 + $0x10] sm:$0xff]
        %v293 = vld [vmem:[%s6 + $0x18] sm:$0xff]
        %v294 = vld [vmem:[%s6 + $0x20] sm:$0xff]
        %v295 = vld [vmem:[%s6 + $0x28] sm:$0xff]
        %v296 = vld [vmem:[%s6 + $0x30] sm:$0xff]
        %v297 = vld [vmem:[%s6 + $0x38] sm:$0xff]
        %v298 = vld [vmem:[%s7] sm:$0x1]
        %v300 = vperm.slane %v298, 0
        %v303 = vsel %vm265, %v289, 0
        %305 = vmatpush.msra.mxu0 0.0
        %306 = vmatpush.msra.mxu0 0.0
        %307 = vmatpush.msra.mxu0 0.0
        %308 = vmatpush.msra.mxu0 0.0
        %309 = vmatpush.msra.mxu0 0.0
        %310 = vmatpush.msra.mxu0 0.0
        %311 = vmatpush.msra.mxu0 0.0
        %312 = vmatpush.msra.mxu0 0.0
        %313 = vmatpush.msra.mxu0 %v297
        %314 = vmatpush.msra.mxu0 %v296
        %315 = vmatpush.msra.mxu0 %v295
        %316 = vmatpush.msra.mxu0 %v294
        %317 = vmatpush.msra.mxu0 %v293
        %318 = vmatpush.msra.mxu0 %v292
        %319 = vmatpush.msra.mxu0 %v291
        %320 = vmatpush.msra.mxu0 %v290
        %321 = vmatmul.f32.gmra.mxu0 %v303
        %v322 = vpop.f32.mrf.mxu0
        %v323 = vadd.f32 %v300, %v322
        %324 = vdwg.mxu0
        %v325 = vlaneseq
        %v326 = vshrl.u32 %v325, 7
        %v327 = vstv %s254
        %vm328 = vcmp.lt.s32.totalorder %v326, %v327
        %v329 = vsel %vm328, 1, 0
        %v330 = vcvt.s32.f32 %v329
        %v331 = vperm.slane %v287, 0
        %v332 = vadd.f32 %v331, %v323
        %v333 = vmax.f32 %v332, 0.0
        %v334 = vmul.f32 %v333, %v330
        %p335 = scmp.gt.s32.totalorder %s253, 0
        %s336 = scalar_select %p335, 1, 0
        %s337 = scvt.s32.f32 %s336
        %v338 = vrot.slane %v334, 4
        %v339 = vadd.f32 %v334, %v338
        %v340 = vrot.slane %v339, 2
        %v341 = vadd.f32 %v339, %v340
        %v342 = vrot.slane %v341, 1
        %v343 = vadd.f32 %v341, %v342
        %v344 = vstv %s337
        %v345 = vmul.f32 %v344, %v343
        %v346 = vadd.f32 %v345, 0.0
        %v347 = vperm.slane %v287, 1
        %v348 = vadd.f32 %v347, %v323
        %v349 = vmax.f32 %v348, 0.0
        %v350 = vmul.f32 %v349, %v330
        %p351 = scmp.gt.s32.totalorder %s253, 1
        %s352 = scalar_select %p351, 1, 0
        %s353 = scvt.s32.f32 %s352
        %v354 = vrot.slane %v350, 4
        %v355 = vadd.f32 %v350, %v354
        %v356 = vrot.slane %v355, 2
        %v357 = vadd.f32 %v355, %v356
        %v358 = vrot.slane %v357, 1
        %v359 = vadd.f32 %v357, %v358
        %v360 = vstv %s353
        %v361 = vmul.f32 %v360, %v359
        %v362 = vadd.f32 %v346, %v361
        %v363 = vperm.slane %v287, 2
        %v364 = vadd.f32 %v363, %v323
        %v365 = vmax.f32 %v364, 0.0
        %v366 = vmul.f32 %v365, %v330
        %p367 = scmp.gt.s32.totalorder %s253, 2
        %s368 = scalar_select %p367, 1, 0
        %s369 = scvt.s32.f32 %s368
        %v370 = vrot.slane %v366, 4
        %v371 = vadd.f32 %v366, %v370
        %v372 = vrot.slane %v371, 2
        %v373 = vadd.f32 %v371, %v372
        %v374 = vrot.slane %v373, 1
        %v375 = vadd.f32 %v373, %v374
        %v376 = vstv %s369
        %v377 = vmul.f32 %v376, %v375
        %v378 = vadd.f32 %v362, %v377
        %v379 = vperm.slane %v287, 3
        %v380 = vadd.f32 %v379, %v323
        %v381 = vmax.f32 %v380, 0.0
        %v382 = vmul.f32 %v381, %v330
        %p383 = scmp.gt.s32.totalorder %s253, 3
        %s384 = scalar_select %p383, 1, 0
        %s385 = scvt.s32.f32 %s384
        %v386 = vrot.slane %v382, 4
        %v387 = vadd.f32 %v382, %v386
        %v388 = vrot.slane %v387, 2
        %v389 = vadd.f32 %v387, %v388
        %v390 = vrot.slane %v389, 1
        %v391 = vadd.f32 %v389, %v390
        %v392 = vstv %s385
        %v393 = vmul.f32 %v392, %v391
        %v394 = vadd.f32 %v378, %v393
        %v395 = vperm.slane %v287, 4
        %v396 = vadd.f32 %v395, %v323
        %v397 = vmax.f32 %v396, 0.0
        %v398 = vmul.f32 %v397, %v330
        %p399 = scmp.gt.s32.totalorder %s253, 4
        %s400 = scalar_select %p399, 1, 0
        %s401 = scvt.s32.f32 %s400
        %v402 = vrot.slane %v398, 4
        %v403 = vadd.f32 %v398, %v402
        %v404 = vrot.slane %v403, 2
        %v405 = vadd.f32 %v403, %v404
        %v406 = vrot.slane %v405, 1
        %v407 = vadd.f32 %v405, %v406
        %v408 = vstv %s401
        %v409 = vmul.f32 %v408, %v407
        %v410 = vadd.f32 %v394, %v409
        %v411 = vperm.slane %v287, 5
        %v412 = vadd.f32 %v411, %v323
        %v413 = vmax.f32 %v412, 0.0
        %v414 = vmul.f32 %v413, %v330
        %p415 = scmp.gt.s32.totalorder %s253, 5
        %s416 = scalar_select %p415, 1, 0
        %s417 = scvt.s32.f32 %s416
        %v418 = vrot.slane %v414, 4
        %v419 = vadd.f32 %v414, %v418
        %v420 = vrot.slane %v419, 2
        %v421 = vadd.f32 %v419, %v420
        %v422 = vrot.slane %v421, 1
        %v423 = vadd.f32 %v421, %v422
        %v424 = vstv %s417
        %v425 = vmul.f32 %v424, %v423
        %v426 = vadd.f32 %v410, %v425
        %v427 = vperm.slane %v287, 6
        %v428 = vadd.f32 %v427, %v323
        %v429 = vmax.f32 %v428, 0.0
        %v430 = vmul.f32 %v429, %v330
        %p431 = scmp.gt.s32.totalorder %s253, 6
        %s432 = scalar_select %p431, 1, 0
        %s433 = scvt.s32.f32 %s432
        %v434 = vrot.slane %v430, 4
        %v435 = vadd.f32 %v430, %v434
        %v436 = vrot.slane %v435, 2
        %v437 = vadd.f32 %v435, %v436
        %v438 = vrot.slane %v437, 1
        %v439 = vadd.f32 %v437, %v438
        %v440 = vstv %s433
        %v441 = vmul.f32 %v440, %v439
        %v442 = vadd.f32 %v426, %v441
        %v443 = vperm.slane %v287, 7
        %v444 = vadd.f32 %v443, %v323
        %v445 = vmax.f32 %v444, 0.0
        %v446 = vmul.f32 %v445, %v330
        %p447 = scmp.gt.s32.totalorder %s253, 7
        %s448 = scalar_select %p447, 1, 0
        %s449 = scvt.s32.f32 %s448
        %v450 = vrot.slane %v446, 4
        %v451 = vadd.f32 %v446, %v450
        %v452 = vrot.slane %v451, 2
        %v453 = vadd.f32 %v451, %v452
        %v454 = vrot.slane %v453, 1
        %v455 = vadd.f32 %v453, %v454
        %v456 = vstv %s449
        %v457 = vmul.f32 %v456, %v455
        %v458 = vadd.f32 %v442, %v457
        %s459 = smul.u32 %s253, %s254
        %s460 = ssub.s32 %s255, %s459
        %s461 = scvt.s32.f32 %s460
        %v462 = vmax.f32 %v298, 0.0
        %v463 = vstv %s461
        %v464 = vmul.f32 %v463, %v462
        %v465 = vadd.f32 %v458, %v464
        %s466 = scvt.s32.f32 %s459
        %v467 = vstv %s466
        %v468 = vrcp.pop %v467
        %v469 = vmul.f32 %v467, %v468
        %v470 = vsub.f32 1.0, %v469
        %v471 = vmul.f32 %v468, %v470
        %v472 = vadd.f32 %v468, %v471
        %vm473 = vweird.f32 %v467
        %vm474 = vweird.f32 %v468
        %vm475 = vmor %vm473, %vm474
        %v476 = vsel %vm475, %v468, %v472
        %v477 = vand.u32 2147483647, %v467
        %vm478 = vcmp.eq.f32.partialorder %v477, 8.507059e+37
        %v479 = vand.u32 %v467, 2147483648
        %v480 = vor.u32 1.1754944e-38, %v479
        %v481 = vsel %vm478, %v480, %v476
        %v482 = vmul.f32 %v465, %v481
        %483 = vst [vmem:[%s244] sm:$0x1] %v482
        %s484 = sand.u32 %s159, 1
        %s485 = scalar_lea.sflag [#allocation7], %s484
        %s486 = sand.u32 %s159, 1
        %s487 = scalar_lea.vmem [#allocation6], %s486
        // Predicated region
        $region41: #{relational_net_forward.1} parent=39 // pred_check
          %p488 = pneg %p169
        $region42: #{relational_net_forward.1} parent=39 // pred_check_branch
          %490 = sbr.rel (%p488) target = $region44
        $region43: #{relational_net_forward.1} parent=39 // pred_region
          %492 = vsyncadd %s485, 0
          %s493 = scalar_lea.hbm %s8, %s36
          %s495 = sshll.u32 %s487, 4
          %s496 = int_to_ptr.vmem [resolvable:$true] %s495
          %s497 = sshll.u32 %s493, 4
          %s498 = int_to_ptr.hbm [resolvable:$true] %s497
          %500 = dma.vmem_to_hbm [thread:$0]  %s496, 16, %s498, %s485
        $region44: #{relational_net_forward.1} parent=39 // pred_fallthru
          _
      $region40: #{relational_net_forward.1} parent=5 // pred_fallthru
        _
      %p501 = scmp.le.s32.totalorder 2, %s31
      // Predicated region
      $region45: #{relational_net_forward.1} parent=5 // pred_check
        %p502 = pneg %p501
      $region46: #{relational_net_forward.1} parent=5 // pred_check_branch
        %504 = sbr.rel (%p502) target = $region48
      $region47: #{relational_net_forward.1} parent=5 // pred_region
        %s505 = ssub.s32 %s31, 2
        // Predicated region
        $region49: #{relational_net_forward.1} parent=47 // pred_check
          %p506 = pneg %p175
        $region50: #{relational_net_forward.1} parent=47 // pred_check_branch
          %508 = sbr.rel (%p506) target = $region52
        $region51: #{relational_net_forward.1} parent=47 // pred_region
          %s509 = sand.u32 %s160, 1
          %s510 = scalar_lea.sflag [#allocation7], %s509
          %s511 = sand.u32 %s160, 1
          %s512 = scalar_lea.vmem [#allocation6], %s511
          %514 = dma.done %s510, 16
        $region52: #{relational_net_forward.1} parent=47 // pred_fallthru
          _
      $region48: #{relational_net_forward.1} parent=5 // pred_fallthru
        _
    $region6: #{relational_net_forward.1} parent=1 // loop_footer
      %s35 = sadd.s32 1, %s31
    $region7: #{relational_net_forward.1} parent=1 // loop_footer_branch
      %30 = sbr.rel target = $region3
    $region8: #{relational_net_forward.1} parent=1 // loop_exit
      _
    %515 = vsyncpa [#allocation7], 1
    %s516 = scalar_lea.sflag [#allocation7], 1
    %517 = vsyncpa %s516, 1

</llo_original>
